<compile_context>
chip_gen: v5e
topology: v5e:2x2
jax: 0.10.0
libtpu: 0.0.40
codegen_flags: <defaults>
</compile_context>

<pallas_src>
import functools

import jax
import jax.numpy as jnp
from jax import lax
from jax.experimental import pallas as pl
from jax.experimental.pallas import tpu as pltpu

BN_EPS = 1e-5


# --------------------------------------------------------------------------
# helpers
# --------------------------------------------------------------------------
def _round_up(n, m):
    return ((n + m - 1) // m) * m


def _vmem_budget_bytes():
    """Per-generation VMEM budget: 3/4 of physical capacity (headroom for
    double buffers / compiler scratch).  ~96 MiB on v5e/v6e, ~48 MiB on v7x."""
    try:
        cap = int(pltpu.get_tpu_info().vmem_capacity_bytes)
    except Exception:
        cap = 64 * 1024 * 1024  # conservative: v7x physical floor
    return (cap * 3) // 4


def _fused_fits(batch, dims, budget):
    """Rough live-footprint estimate of the fused (grid-less) kernel."""
    hp, lp, in_dim = dims["Hp"], dims["Lp"], dims["input_dim"]
    act = batch * (in_dim + 3 * hp + lp) * 4                       # f32 activations
    par = (in_dim * hp + hp * hp + hp * lp) * 2 + (8 * hp + lp) * 4  # bf16 W + f32 small
    return act + par < budget // 2


def _pick_batch_tile(batch, hp, budget):
    """Largest multiple-of-8 divisor of batch whose per-step activations fit
    comfortably (biggest tile that fits = main pipelining lever)."""
    cap_rows = max(8, budget // (16 * hp * 4))
    best = None
    for cand in range(8, min(batch, 2048) + 1, 8):
        if batch % cand == 0 and cand <= cap_rows:
            best = cand
    return best


# --------------------------------------------------------------------------
# fused (grid-less) kernel — small batches
# --------------------------------------------------------------------------
def _linear_bn_relu(x_bf16, w_ref, gamma, beta):
    """Hidden block: Linear (bias-free) -> BatchNorm1d (batch stats) -> ReLU."""
    h = jnp.dot(x_bf16, w_ref[...], preferred_element_type=jnp.float32)  # (B, Hp)
    mean = jnp.mean(h, axis=0, keepdims=True)          # sublane reduce, lanes intact
    hc = h - mean
    var = jnp.mean(hc * hc, axis=0, keepdims=True)     # biased batch variance
    s = gamma * lax.rsqrt(var + BN_EPS)                # folded BN scale (EUP rsqrt)
    h = hc * s + beta
    h = jnp.maximum(h, 0.0)
    return h.astype(jnp.bfloat16)                      # bf16 feed for next MXU push


def _fused_kernel(x_ref, w0_ref, w1_ref, wo_ref, pk_ref, bo_ref, o_ref):
    pk = pk_ref[...]                                   # (8, Hp) f32, one small DMA
    x = x_ref[...].astype(jnp.bfloat16)                # cast in-kernel (no wrapper op)
    h = _linear_bn_relu(x, w0_ref, pk[0:1, :], pk[1:2, :])
    h = _linear_bn_relu(h, w1_ref, pk[2:3, :], pk[3:4, :])
    o_ref[...] = jnp.dot(h, wo_ref[...], preferred_element_type=jnp.float32) + bo_ref[...]


def _forward_fused(x, prep, budget):
    batch = x.shape[0]
    lp = prep["dims"]["Lp"]
    vmem = pl.BlockSpec(memory_space=pltpu.MemorySpace.VMEM)
    return pl.pallas_call(
        _fused_kernel,
        out_shape=jax.ShapeDtypeStruct((batch, lp), jnp.float32),
        in_specs=[vmem] * 6,
        out_specs=vmem,
        compiler_params=pltpu.CompilerParams(vmem_limit_bytes=budget),
    )(x, prep["w0"], prep["w1"], prep["wo"], prep["packed"], prep["bo"])


# --------------------------------------------------------------------------
# batch-tiled two-pass kernels — large batches / v7x
# --------------------------------------------------------------------------
def _linear_stats_kernel(x_ref, w_ref, z_ref, st_ref):
    """Stage A: z = x @ W0 (tile), accumulate [sum, sumsq] per feature."""
    z = jnp.dot(x_ref[...].astype(jnp.bfloat16), w_ref[...],
                preferred_element_type=jnp.float32)
    stats = jnp.concatenate([jnp.sum(z, axis=0, keepdims=True),
                             jnp.sum(z * z, axis=0, keepdims=True)], axis=0)

    @pl.when(pl.program_id(0) == 0)
    def _():
        st_ref[...] = jnp.zeros_like(st_ref)

    st_ref[...] += stats
    z_ref[...] = z


def _bn_from_stats(st_ref, pk_ref, inv_n, g_row):
    mean = st_ref[0:1, :] * inv_n
    var = jnp.maximum(st_ref[1:2, :] * inv_n - mean * mean, 0.0)
    s = pk_ref[g_row:g_row + 1, :] * lax.rsqrt(var + BN_EPS)
    beta = pk_ref[g_row + 1:g_row + 2, :]
    return mean, s, beta


def _bn_relu_linear_stats_kernel(z_ref, st_in_ref, pk_ref, w_ref,
                                 z_out_ref, st_out_ref, *, inv_n, g_row):
    """Stage B: normalize z (full-batch stats) -> ReLU -> z_out = a @ W1,
    accumulate next layer's [sum, sumsq]."""
    mean, s, beta = _bn_from_stats(st_in_ref, pk_ref, inv_n, g_row)
    a = jnp.maximum((z_ref[...] - mean) * s + beta, 0.0).astype(jnp.bfloat16)
    z = jnp.dot(a, w_ref[...], preferred_element_type=jnp.float32)
    stats = jnp.concatenate([jnp.sum(z, axis=0, keepdims=True),
                             jnp.sum(z * z, axis=0, keepdims=True)], axis=0)

    @pl.when(pl.program_id(0) == 0)
    def _():
        st_out_ref[...] = jnp.zeros_like(st_out_ref)

    st_out_ref[...] += stats
    z_out_ref[...] = z


def _bn_relu_linear_out_kernel(z_ref, st_ref, pk_ref, w_ref, b_ref, o_ref,
                               *, inv_n, g_row):
    """Stage C: normalize -> ReLU -> logits = a @ Wo + bo  (batch-parallel)."""
    mean, s, beta = _bn_from_stats(st_ref, pk_ref, inv_n, g_row)
    a = jnp.maximum((z_ref[...] - mean) * s + beta, 0.0).astype(jnp.bfloat16)
    o_ref[...] = jnp.dot(a, w_ref[...], preferred_element_type=jnp.float32) + b_ref[...]


def _forward_tiled(x, prep, bt, budget):
    batch, in_dim = x.shape
    d = prep["dims"]
    hp, lp = d["Hp"], d["Lp"]
    n_tiles = batch // bt
    inv_n = 1.0 / batch

    cp_arb = pltpu.CompilerParams(dimension_semantics=("arbitrary",),
                                  vmem_limit_bytes=budget)
    cp_par = pltpu.CompilerParams(dimension_semantics=("parallel",),
                                  vmem_limit_bytes=budget)

    # index_maps for weights / stats / packed params ignore the batch axis ->
    # DMA'd once, VMEM-resident across all grid steps.
    w_in_spec = pl.BlockSpec((in_dim, hp), lambda t: (0, 0))
    w_hh_spec = pl.BlockSpec((hp, hp), lambda t: (0, 0))
    w_ho_spec = pl.BlockSpec((hp, lp), lambda t: (0, 0))
    st_spec = pl.BlockSpec((2, hp), lambda t: (0, 0))
    pk_spec = pl.BlockSpec((8, hp), lambda t: (0, 0))
    bo_spec = pl.BlockSpec((1, lp), lambda t: (0, 0))

    # Stage A: first Linear + batch statistics.
    z0, st0 = pl.pallas_call(
        _linear_stats_kernel,
        grid=(n_tiles,),
        out_shape=(jax.ShapeDtypeStruct((batch, hp), jnp.float32),
                   jax.ShapeDtypeStruct((2, hp), jnp.float32)),
        in_specs=[pl.BlockSpec((bt, in_dim), lambda t: (t, 0)), w_in_spec],
        out_specs=(pl.BlockSpec((bt, hp), lambda t: (t, 0)), st_spec),
        compiler_params=cp_arb,
    )(x, prep["w0"])

    # Stage B: BN(stats0) + ReLU + second Linear + batch statistics.
    z1, st1 = pl.pallas_call(
        functools.partial(_bn_relu_linear_stats_kernel, inv_n=inv_n, g_row=0),
        grid=(n_tiles,),
        out_shape=(jax.ShapeDtypeStruct((batch, hp), jnp.float32),
                   jax.ShapeDtypeStruct((2, hp), jnp.float32)),
        in_specs=[pl.BlockSpec((bt, hp), lambda t: (t, 0)),
                  st_spec, pk_spec, w_hh_spec],
        out_specs=(pl.BlockSpec((bt, hp), lambda t: (t, 0)), st_spec),
        compiler_params=cp_arb,
    )(z0, st0, prep["packed"], prep["w1"])

    # Stage C: BN(stats1) + ReLU + output Linear.  Batch axis 'parallel'.
    out = pl.pallas_call(
        functools.partial(_bn_relu_linear_out_kernel, inv_n=inv_n, g_row=2),
        grid=(n_tiles,),
        out_shape=jax.ShapeDtypeStruct((batch, lp), jnp.float32),
        in_specs=[pl.BlockSpec((bt, hp), lambda t: (t, 0)),
                  st_spec, pk_spec, w_ho_spec, bo_spec],
        out_specs=pl.BlockSpec((bt, lp), lambda t: (t, 0)),
        compiler_params=cp_par,
    )(z1, st1, prep["packed"], prep["wo"], prep["bo"])
    return out


# --------------------------------------------------------------------------
# public wrapper
# --------------------------------------------------------------------------
def speaker_encoder(x, prep, *, batch_tile=None, force_tiled=False):
    """SpeakerEncoder forward.  x: (batch, input_dim) f32.  Returns (batch, latent_dim)."""
    batch = x.shape[0]
    d = prep["dims"]
    budget = _vmem_budget_bytes()

    use_tiled = force_tiled or not _fused_fits(batch, d, budget)
    if use_tiled:
        bt = batch_tile if batch_tile is not None else _pick_batch_tile(batch, d["Hp"], budget)
        if bt is not None and bt % 8 == 0 and batch % bt == 0:
            out_p = _forward_tiled(x, prep, bt, budget)
        else:
            out_p = _forward_fused(x, prep, budget)
    else:
        out_p = _forward_fused(x, prep, budget)

    # Lane-dense padded slab -> module-shaped logits (cheap lazy slice).
    return out_p[:, :d["latent_dim"]]


def prepare_params(params):
    """One-time prep: cast matmul operands to bf16, zero-pad feature axes to
    lane width (128), pack the small per-feature params into one (8, Hp) f32
    array.  Done once, NOT per call."""
    input_dim, hidden_dim = params["w0"].shape
    latent_dim = params["wo"].shape[1]
    hp = _round_up(hidden_dim, 128)
    lp = _round_up(latent_dim, 128)

    w0 = jnp.zeros((input_dim, hp), jnp.bfloat16).at[:, :hidden_dim].set(
        params["w0"].astype(jnp.bfloat16))
    w1 = jnp.zeros((hp, hp), jnp.bfloat16).at[:hidden_dim, :hidden_dim].set(
        params["w1"].astype(jnp.bfloat16))
    wo = jnp.zeros((hp, lp), jnp.bfloat16).at[:hidden_dim, :latent_dim].set(
        params["wo"].astype(jnp.bfloat16))

    packed = jnp.zeros((8, hp), jnp.float32)
    packed = packed.at[0, :hidden_dim].set(params["g0"][0])
    packed = packed.at[1, :hidden_dim].set(params["beta0"][0])
    packed = packed.at[2, :hidden_dim].set(params["g1"][0])
    packed = packed.at[3, :hidden_dim].set(params["beta1"][0])

    bo = jnp.zeros((1, lp), jnp.float32).at[:, :latent_dim].set(params["bo"])

    return {
        "w0": w0, "w1": w1, "wo": wo, "packed": packed, "bo": bo,
        "dims": {"input_dim": input_dim, "hidden_dim": hidden_dim,
                 "latent_dim": latent_dim, "Hp": hp, "Lp": lp},
    }


def make_params(key, input_dim, hidden_dim, latent_dim):
    """Deterministic synthetic parameter init (mirrors module shapes)."""
    keys = jax.random.split(key, 8)

    def lin(k, fan_in, fan_out):
        scale = 1.0 / jnp.sqrt(fan_in)
        kw, kb = jax.random.split(k)
        w = jax.random.uniform(kw, (fan_in, fan_out), jnp.float32, -scale, scale)
        b = jax.random.uniform(kb, (1, fan_out), jnp.float32, -scale, scale)
        return w, b

    w0, b0 = lin(keys[0], input_dim, hidden_dim)
    w1, b1 = lin(keys[1], hidden_dim, hidden_dim)
    wo, bo = lin(keys[2], hidden_dim, latent_dim)

    g0 = 1.0 + 0.1 * jax.random.normal(keys[3], (1, hidden_dim), jnp.float32)
    beta0 = 0.1 * jax.random.normal(keys[4], (1, hidden_dim), jnp.float32)
    g1 = 1.0 + 0.1 * jax.random.normal(keys[5], (1, hidden_dim), jnp.float32)
    beta1 = 0.1 * jax.random.normal(keys[6], (1, hidden_dim), jnp.float32)

    return {"w0": w0, "b0": b0, "g0": g0, "beta0": beta0,
            "w1": w1, "b1": b1, "g1": g1, "beta1": beta1,
            "wo": wo, "bo": bo}


# --------------------------------------------------------------------------
# references
# --------------------------------------------------------------------------
def reference_forward_f32(x, p):
    """Faithful f32 module semantics (Linear biases + classic training-mode BN)."""
    h = x
    for w, b, g, bt in ((p["w0"], p["b0"], p["g0"], p["beta0"]),
                        (p["w1"], p["b1"], p["g1"], p["beta1"])):
        h = h @ w + b
        mean = jnp.mean(h, axis=0, keepdims=True)
        var = jnp.mean((h - mean) ** 2, axis=0, keepdims=True)
        h = g * (h - mean) / jnp.sqrt(var + BN_EPS) + bt
        h = jnp.maximum(h, 0.0)
    return h @ p["wo"] + p["bo"]


def reference_forward_bf16(x, p):
    """Pure-JAX mirror of the kernel algorithm (bf16 matmuls, folded BN, f32 stats)."""
    h = x.astype(jnp.bfloat16)
    for w, g, bt in ((p["w0"], p["g0"], p["beta0"]),
                     (p["w1"], p["g1"], p["beta1"])):
        z = jnp.dot(h, w.astype(jnp.bfloat16), preferred_element_type=jnp.float32)
        mean = jnp.mean(z, axis=0, keepdims=True)
        zc = z - mean
        var = jnp.mean(zc * zc, axis=0, keepdims=True)
        s = g * lax.rsqrt(var + BN_EPS)
        h = jnp.maximum(zc * s + bt, 0.0).astype(jnp.bfloat16)
    return jnp.dot(h, p["wo"].astype(jnp.bfloat16),
                   preferred_element_type=jnp.float32) + p["bo"]


# --------------------------------------------------------------------------
# demo / self-test
# --------------------------------------------------------------------------
if __name__ == "__main__":
    batch, input_dim, hidden_dim, latent_dim = 8, 32, 32, 16

    key = jax.random.PRNGKey(0)
    kx, kp, kxb = jax.random.split(key, 3)
    x = jax.random.normal(kx, (batch, input_dim), jnp.float32)
    params = make_params(kp, input_dim, hidden_dim, latent_dim)
    prepared = prepare_params(params)

    # Fused path (small batch).
    out = jax.block_until_ready(speaker_encoder(x, prepared))
    assert out.shape == (batch, latent_dim)
    ref_bf = reference_forward_bf16(x, params)
    ref_f32 = reference_forward_f32(x, params)
    assert jnp.allclose(out, ref_bf, atol=3e-3, rtol=3e-3), "fused: mismatch vs bf16 mirror"
    assert jnp.allclose(out, ref_f32, atol=5e-2, rtol=5e-2), "fused: mismatch vs f32 reference"

    # Batch-tiled two-pass path (what large batches / v7x use).
    big_batch = 256
    xb = jax.random.normal(kxb, (big_batch, input_dim), jnp.float32)
    out_t = jax.block_until_ready(
        speaker_encoder(xb, prepared, force_tiled=True, batch_tile=64))
    assert out_t.shape == (big_batch, latent_dim)
    refb_bf = reference_forward_bf16(xb, params)
    refb_f32 = reference_forward_f32(xb, params)
    assert jnp.allclose(out_t, refb_bf, atol=1e-2, rtol=1e-2), "tiled: mismatch vs bf16 mirror"
    assert jnp.allclose(out_t, refb_f32, atol=5e-2, rtol=5e-2), "tiled: mismatch vs f32 reference"

    print("KERNEL_OK")
</pallas_src>

<mosaic_0001>
module attributes {stable_mosaic.version = 11 : i64} {
  func.func @_fused_kernel(%arg0: memref<8x32xf32, #tpu.memory_space<vmem>>, %arg1: memref<32x128xbf16, #tpu.memory_space<vmem>>, %arg2: memref<128x128xbf16, #tpu.memory_space<vmem>>, %arg3: memref<128x128xbf16, #tpu.memory_space<vmem>>, %arg4: memref<8x128xf32, #tpu.memory_space<vmem>>, %arg5: memref<1x128xf32, #tpu.memory_space<vmem>>, %arg6: memref<8x128xf32, #tpu.memory_space<vmem>>) attributes {dimension_semantics = [], scalar_prefetch = 0 : i64, scratch_operands = 0 : i64, tpu.core_type = #tpu.core_type<tc>} {
    %c0 = arith.constant 0 : index
    %c0_0 = arith.constant 0 : index
    %0 = vector.load %arg4[%c0, %c0_0] : memref<8x128xf32, #tpu.memory_space<vmem>>, vector<8x128xf32>
    %c0_1 = arith.constant 0 : index
    %c0_2 = arith.constant 0 : index
    %1 = vector.load %arg0[%c0_1, %c0_2] : memref<8x32xf32, #tpu.memory_space<vmem>>, vector<8x32xf32>
    %2 = arith.truncf %1 : vector<8x32xf32> to vector<8x32xbf16>
    %3 = vector.extract_strided_slice %0 {offsets = [0, 0], sizes = [1, 128], strides = [1, 1]} : vector<8x128xf32> to vector<1x128xf32>
    %4 = vector.extract_strided_slice %0 {offsets = [1, 0], sizes = [1, 128], strides = [1, 1]} : vector<8x128xf32> to vector<1x128xf32>
    %c0_3 = arith.constant 0 : index
    %c0_4 = arith.constant 0 : index
    %5 = vector.load %arg1[%c0_3, %c0_4] : memref<32x128xbf16, #tpu.memory_space<vmem>>, vector<32x128xbf16>
    %cst = arith.constant dense<0.000000e+00> : vector<8x128xf32>
    %6 = tpu.matmul %2, %5, %cst {dimension_numbers = #tpu.dot_dimension_numbers<[1], [0], [0], [1], [0, 0, 1, 1], [], []>} : vector<8x32xbf16>, vector<32x128xbf16>, vector<8x128xf32> -> vector<8x128xf32>
    %cst_5 = arith.constant dense<0.000000e+00> : vector<128xf32>
    %7 = vector.multi_reduction <add>, %6, %cst_5 [0] : vector<8x128xf32> to vector<128xf32>
    %8 = vector.shape_cast %7 : vector<128xf32> to vector<1x128xf32>
    %cst_6 = arith.constant 8.000000e+00 : f32
    %9 = vector.broadcast %cst_6 : f32 to vector<1x128xf32>
    %10 = arith.divf %8, %9 : vector<1x128xf32>
    %11 = vector.broadcast %10 : vector<1x128xf32> to vector<8x128xf32>
    %12 = arith.subf %6, %11 : vector<8x128xf32>
    %13 = arith.mulf %12, %12 : vector<8x128xf32>
    %cst_7 = arith.constant dense<0.000000e+00> : vector<128xf32>
    %14 = vector.multi_reduction <add>, %13, %cst_7 [0] : vector<8x128xf32> to vector<128xf32>
    %15 = vector.shape_cast %14 : vector<128xf32> to vector<1x128xf32>
    %cst_8 = arith.constant 8.000000e+00 : f32
    %16 = vector.broadcast %cst_8 : f32 to vector<1x128xf32>
    %17 = arith.divf %15, %16 : vector<1x128xf32>
    %cst_9 = arith.constant 9.99999974E-6 : f32
    %18 = vector.broadcast %cst_9 : f32 to vector<1x128xf32>
    %19 = arith.addf %17, %18 : vector<1x128xf32>
    %20 = math.rsqrt %19 : vector<1x128xf32>
    %21 = arith.mulf %3, %20 : vector<1x128xf32>
    %22 = vector.broadcast %21 : vector<1x128xf32> to vector<8x128xf32>
    %23 = arith.mulf %12, %22 : vector<8x128xf32>
    %24 = vector.broadcast %4 : vector<1x128xf32> to vector<8x128xf32>
    %25 = arith.addf %23, %24 : vector<8x128xf32>
    %cst_10 = arith.constant 0.000000e+00 : f32
    %26 = vector.broadcast %cst_10 : f32 to vector<8x128xf32>
    %27 = arith.maximumf %25, %26 : vector<8x128xf32>
    %28 = arith.truncf %27 : vector<8x128xf32> to vector<8x128xbf16>
    %29 = vector.extract_strided_slice %0 {offsets = [2, 0], sizes = [1, 128], strides = [1, 1]} : vector<8x128xf32> to vector<1x128xf32>
    %30 = vector.extract_strided_slice %0 {offsets = [3, 0], sizes = [1, 128], strides = [1, 1]} : vector<8x128xf32> to vector<1x128xf32>
    %c0_11 = arith.constant 0 : index
    %c0_12 = arith.constant 0 : index
    %31 = vector.load %arg2[%c0_11, %c0_12] : memref<128x128xbf16, #tpu.memory_space<vmem>>, vector<128x128xbf16>
    %cst_13 = arith.constant dense<0.000000e+00> : vector<8x128xf32>
    %32 = tpu.matmul %28, %31, %cst_13 {dimension_numbers = #tpu.dot_dimension_numbers<[1], [0], [0], [1], [0, 0, 1, 1], [], []>} : vector<8x128xbf16>, vector<128x128xbf16>, vector<8x128xf32> -> vector<8x128xf32>
    %cst_14 = arith.constant dense<0.000000e+00> : vector<128xf32>
    %33 = vector.multi_reduction <add>, %32, %cst_14 [0] : vector<8x128xf32> to vector<128xf32>
    %34 = vector.shape_cast %33 : vector<128xf32> to vector<1x128xf32>
    %cst_15 = arith.constant 8.000000e+00 : f32
    %35 = vector.broadcast %cst_15 : f32 to vector<1x128xf32>
    %36 = arith.divf %34, %35 : vector<1x128xf32>
    %37 = vector.broadcast %36 : vector<1x128xf32> to vector<8x128xf32>
    %38 = arith.subf %32, %37 : vector<8x128xf32>
    %39 = arith.mulf %38, %38 : vector<8x128xf32>
    %cst_16 = arith.constant dense<0.000000e+00> : vector<128xf32>
    %40 = vector.multi_reduction <add>, %39, %cst_16 [0] : vector<8x128xf32> to vector<128xf32>
    %41 = vector.shape_cast %40 : vector<128xf32> to vector<1x128xf32>
    %cst_17 = arith.constant 8.000000e+00 : f32
    %42 = vector.broadcast %cst_17 : f32 to vector<1x128xf32>
    %43 = arith.divf %41, %42 : vector<1x128xf32>
    %cst_18 = arith.constant 9.99999974E-6 : f32
    %44 = vector.broadcast %cst_18 : f32 to vector<1x128xf32>
    %45 = arith.addf %43, %44 : vector<1x128xf32>
    %46 = math.rsqrt %45 : vector<1x128xf32>
    %47 = arith.mulf %29, %46 : vector<1x128xf32>
    %48 = vector.broadcast %47 : vector<1x128xf32> to vector<8x128xf32>
    %49 = arith.mulf %38, %48 : vector<8x128xf32>
    %50 = vector.broadcast %30 : vector<1x128xf32> to vector<8x128xf32>
    %51 = arith.addf %49, %50 : vector<8x128xf32>
    %cst_19 = arith.constant 0.000000e+00 : f32
    %52 = vector.broadcast %cst_19 : f32 to vector<8x128xf32>
    %53 = arith.maximumf %51, %52 : vector<8x128xf32>
    %54 = arith.truncf %53 : vector<8x128xf32> to vector<8x128xbf16>
    %c0_20 = arith.constant 0 : index
    %c0_21 = arith.constant 0 : index
    %55 = vector.load %arg3[%c0_20, %c0_21] : memref<128x128xbf16, #tpu.memory_space<vmem>>, vector<128x128xbf16>
    %cst_22 = arith.constant dense<0.000000e+00> : vector<8x128xf32>
    %56 = tpu.matmul %54, %55, %cst_22 {dimension_numbers = #tpu.dot_dimension_numbers<[1], [0], [0], [1], [0, 0, 1, 1], [], []>} : vector<8x128xbf16>, vector<128x128xbf16>, vector<8x128xf32> -> vector<8x128xf32>
    %c0_23 = arith.constant 0 : index
    %c0_24 = arith.constant 0 : index
    %57 = vector.load %arg5[%c0_23, %c0_24] : memref<1x128xf32, #tpu.memory_space<vmem>>, vector<1x128xf32>
    %58 = vector.broadcast %57 : vector<1x128xf32> to vector<8x128xf32>
    %59 = arith.addf %56, %58 : vector<8x128xf32>
    %c0_25 = arith.constant 0 : index
    %c0_26 = arith.constant 0 : index
    %60 = vector.load %arg6[%c0_25, %c0_26] : memref<8x128xf32, #tpu.memory_space<vmem>>, vector<8x128xf32>
    tpu.vector_store %arg6[%c0_25, %c0_26], %59 {strides = array<i32>} : memref<8x128xf32, #tpu.memory_space<vmem>>, vector<8x128xf32>,
    return
  }
}

</mosaic_0001>

<llo_original>
// kernel: tpu_custom_call.1
$region0: #{tpu_custom_call.1}
  #allocation0 [shape = 'u32[]', space=smem, size = 0x4, offset = 0x4, fixed_abs, tag = 'smem constant byte address 0x4 - core index']
  #allocation1 [shape = 'u32[72,128]{1,0:T(1,128)}', space=vmem, size = 0x9000, scoped, tag = 'internal scratch']
  %s0 = inlined_call_operand.hbm [shape: f32[8,32], index: 0, kind: input, shape index: {}]
  %s1 = inlined_call_operand.hbm [shape: bf16[32,128], index: 1, kind: input, shape index: {}]
  %s2 = inlined_call_operand.hbm [shape: bf16[128,128], index: 2, kind: input, shape index: {}]
  %s3 = inlined_call_operand.hbm [shape: bf16[128,128], index: 3, kind: input, shape index: {}]
  %s4 = inlined_call_operand.hbm [shape: f32[8,128], index: 4, kind: input, shape index: {}]
  %s5 = inlined_call_operand.vmem [shape: f32[1,128], index: 5, kind: input, shape index: {}]
  %s6 = inlined_call_operand.hbm [shape: f32[8,128], index: 6, kind: output, shape index: {}]
  %s7 = sld [smem:[#allocation0]]
  $region54: #{tpu_custom_call.1} parent=0
    _
  %s9 = ssub.s32 1, %s7
  %s10 = scalar_select 0, %s9, %s7
  $region1: #{tpu_custom_call.1} parent=0
    #allocation2 [shape = 'u8[4096]{0}', space=vmem, size = 0x1000, scoped, tag = 'input window, operand 0, single buffered']
    #allocation3 [shape = 's32[1]{0}', space=sflag, size = 0x4, scoped, tag = 'scoped memory for tpu_custom_call.1']
    #allocation4 [shape = 's32[1]{0}', space=sflag, size = 0x4, scoped, tag = 'scoped memory for tpu_custom_call.1']
    #allocation5 [shape = 'u8[8192]{0}', space=vmem, size = 0x2000, scoped, tag = 'input window, operand 1, single buffered']
    #allocation6 [shape = 's32[1]{0}', space=sflag, size = 0x4, scoped, tag = 'scoped memory for tpu_custom_call.1']
    #allocation7 [shape = 'u8[32768]{0}', space=vmem, size = 0x8000, scoped, tag = 'input window, operand 2, single buffered']
    #allocation8 [shape = 'u8[32768]{0}', space=vmem, size = 0x8000, scoped, tag = 'input window, operand 3, single buffered']
    #allocation9 [shape = 's32[1]{0}', space=sflag, size = 0x4, scoped, tag = 'scoped memory for tpu_custom_call.1']
    #allocation10 [shape = 'u8[4096]{0}', space=vmem, size = 0x1000, scoped, tag = 'input window, operand 4, single buffered']
    #allocation11 [shape = 'u8[4096]{0}', space=vmem, size = 0x1000, scoped, tag = 'output window, operand 0, single buffered']
    %11 = vsyncpa [#allocation3], 0
    %12 = vsyncpa [#allocation6], 0
    %13 = vsyncpa [#allocation9], 0
    %14 = vsyncpa [#allocation4], 0
    // Predicated region
    $region2: #{tpu_custom_call.1} parent=1 // pred_check
      _
    $region3: #{tpu_custom_call.1} parent=1 // pred_check_branch
      %16 = sbr.rel (0) target = $region5
    $region4: #{tpu_custom_call.1} parent=1 // pred_region
      %18 = vsyncadd [#allocation3], 0
      %s20 = sshll.u32 %s0, 4
      %s21 = int_to_ptr.hbm [resolvable:$true] %s20
      %s22 = sshll.u32 [#allocation2], 4
      %s23 = int_to_ptr.vmem [resolvable:$true] %s22
      %25 = dma.hbm_to_vmem [thread:$0]  %s21, 128, %s23, [#allocation3]
    $region5: #{tpu_custom_call.1} parent=1 // pred_fallthru
      _
    // Predicated region
    $region6: #{tpu_custom_call.1} parent=1 // pred_check
      _
    $region7: #{tpu_custom_call.1} parent=1 // pred_check_branch
      %27 = sbr.rel (0) target = $region9
    $region8: #{tpu_custom_call.1} parent=1 // pred_region
      %29 = vsyncadd [#allocation6], 0
      %s30 = sshll.u32 %s1, 4
      %s31 = int_to_ptr.hbm [resolvable:$true] %s30
      %s32 = sshll.u32 [#allocation5], 4
      %s33 = int_to_ptr.vmem [resolvable:$true] %s32
      %38 = dma.hbm_to_vmem [thread:$0]  %s31, 256, %s33, [#allocation6], 64, 64, 4
    $region9: #{tpu_custom_call.1} parent=1 // pred_fallthru
      _
    // Predicated region
    $region10: #{tpu_custom_call.1} parent=1 // pred_check
      _
    $region11: #{tpu_custom_call.1} parent=1 // pred_check_branch
      %40 = sbr.rel (0) target = $region13
    $region12: #{tpu_custom_call.1} parent=1 // pred_region
      %42 = vsyncadd [#allocation6], 0
      %s43 = sshll.u32 %s2, 4
      %s44 = int_to_ptr.hbm [resolvable:$true] %s43
      %s45 = sshll.u32 [#allocation7], 4
      %s46 = int_to_ptr.vmem [resolvable:$true] %s45
      %51 = dma.hbm_to_vmem [thread:$0]  %s44, 1024, %s46, [#allocation6], 64, 64, 4
    $region13: #{tpu_custom_call.1} parent=1 // pred_fallthru
      _
    // Predicated region
    $region14: #{tpu_custom_call.1} parent=1 // pred_check
      _
    $region15: #{tpu_custom_call.1} parent=1 // pred_check_branch
      %53 = sbr.rel (0) target = $region17
    $region16: #{tpu_custom_call.1} parent=1 // pred_region
      %55 = vsyncadd [#allocation9], 0
      %s56 = sshll.u32 %s3, 4
      %s57 = int_to_ptr.hbm [resolvable:$true] %s56
      %s58 = sshll.u32 [#allocation8], 4
      %s59 = int_to_ptr.vmem [resolvable:$true] %s58
      %64 = dma.hbm_to_vmem [thread:$0]  %s57, 1024, %s59, [#allocation9], 64, 64, 4
    $region17: #{tpu_custom_call.1} parent=1 // pred_fallthru
      _
    // Predicated region
    $region18: #{tpu_custom_call.1} parent=1 // pred_check
      _
    $region19: #{tpu_custom_call.1} parent=1 // pred_check_branch
      %66 = sbr.rel (0) target = $region21
    $region20: #{tpu_custom_call.1} parent=1 // pred_region
      %68 = vsyncadd [#allocation9], 0
      %s70 = sshll.u32 %s4, 4
      %s71 = int_to_ptr.hbm [resolvable:$true] %s70
      %s72 = sshll.u32 [#allocation10], 4
      %s73 = int_to_ptr.vmem [resolvable:$true] %s72
      %75 = dma.hbm_to_vmem [thread:$0]  %s71, 128, %s73, [#allocation9]
    $region21: #{tpu_custom_call.1} parent=1 // pred_fallthru
      _
    // Predicated region
    $region22: #{tpu_custom_call.1} parent=1 // pred_check
      _
    $region23: #{tpu_custom_call.1} parent=1 // pred_check_branch
      %77 = sbr.rel (0) target = $region25
    $region24: #{tpu_custom_call.1} parent=1 // pred_region
      _
    $region25: #{tpu_custom_call.1} parent=1 // pred_fallthru
      _
    // Predicated region
    $region26: #{tpu_custom_call.1} parent=1 // pred_check
      _
    $region27: #{tpu_custom_call.1} parent=1 // pred_check_branch
      %79 = sbr.rel (0) target = $region29
    $region28: #{tpu_custom_call.1} parent=1 // pred_region
      %81 = dma.done [#allocation3], 128
    $region29: #{tpu_custom_call.1} parent=1 // pred_fallthru
      _
    // Predicated region
    $region30: #{tpu_custom_call.1} parent=1 // pred_check
      _
    $region31: #{tpu_custom_call.1} parent=1 // pred_check_branch
      %83 = sbr.rel (0) target = $region33
    $region32: #{tpu_custom_call.1} parent=1 // pred_region
      %85 = dma.done [#allocation6], 256
    $region33: #{tpu_custom_call.1} parent=1 // pred_fallthru
      _
    // Predicated region
    $region34: #{tpu_custom_call.1} parent=1 // pred_check
      _
    $region35: #{tpu_custom_call.1} parent=1 // pred_check_branch
      %87 = sbr.rel (0) target = $region37
    $region36: #{tpu_custom_call.1} parent=1 // pred_region
      %89 = dma.done [#allocation6], 1024
    $region37: #{tpu_custom_call.1} parent=1 // pred_fallthru
      _
    // Predicated region
    $region38: #{tpu_custom_call.1} parent=1 // pred_check
      _
    $region39: #{tpu_custom_call.1} parent=1 // pred_check_branch
      %91 = sbr.rel (0) target = $region41
    $region40: #{tpu_custom_call.1} parent=1 // pred_region
      %93 = dma.done [#allocation9], 1024
    $region41: #{tpu_custom_call.1} parent=1 // pred_fallthru
      _
    // Predicated region
    $region42: #{tpu_custom_call.1} parent=1 // pred_check
      _
    $region43: #{tpu_custom_call.1} parent=1 // pred_check_branch
      %95 = sbr.rel (0) target = $region45
    $region44: #{tpu_custom_call.1} parent=1 // pred_region
      %97 = dma.done [#allocation9], 128
    $region45: #{tpu_custom_call.1} parent=1 // pred_fallthru
      _
    %v99 = vld [vmem:[#allocation10] sm:$0xff]
    %v100 = vld [vmem:[#allocation2] sm:$0xff]
    %v101 = vpack.c.bf16 %v100, %v100
    %v102 = vld [vmem:[#allocation5] sm:$0xf]
    %v103 = vld [vmem:[#allocation5 + $0x4] sm:$0xf]
    %v104 = vld [vmem:[#allocation5 + $0x8] sm:$0xf]
    %v105 = vld [vmem:[#allocation5 + $0xc] sm:$0xf]
    %v110 = vunpack.c.l.b16 %v102
    %v111 = vunpack.c.l.b16 %v103
    %v112 = vunpack.c.l.b16 %v104
    %v113 = vunpack.c.l.b16 %v105
    %v114 = vpack.c.b16 %v111, %v110
    %v115 = vpack.c.b16 %v113, %v112
    %vm118 = vcmask 261120
    %v120 = vsel %vm118, %v101, 0
    %122 = vmatpush.bf16.msra.mxu0 0
    %123 = vmatpush.bf16.msra.mxu0 0
    %124 = vmatpush.bf16.msra.mxu0 0
    %125 = vmatpush.bf16.msra.mxu0 0
    %126 = vmatpush.bf16.msra.mxu0 0
    %127 = vmatpush.bf16.msra.mxu0 0
    %128 = vmatpush.bf16.msra.mxu0 %v115
    %129 = vmatpush.bf16.msra.mxu0 %v114
    %130 = vmatmul.bf16.gmra.mxu0 %v120
    %v131 = vpop.f32.mrf.mxu0
    %v132 = vadd.f32 0.0, %v131
    %v133 = vpop.f32.mrf.mxu0
    %134 = vdwg.mxu0
    %v135 = vrot.slane %v132, 4
    %v136 = vadd.f32 %v132, %v135
    %v137 = vrot.slane %v136, 2
    %v138 = vadd.f32 %v136, %v137
    %v139 = vrot.slane %v138, 1
    %v140 = vadd.f32 %v138, %v139
    %v141 = vrcp.pop 8.0
    %v142 = vmul.f32 8.0, %v141
    %v143 = vsub.f32 1.0, %v142
    %v144 = vmul.f32 %v141, %v143
    %v145 = vadd.f32 %v141, %v144
    %vm146 = vweird.f32 %v141
    %v147 = vsel %vm146, %v141, %v145
    %v148 = vmul.f32 %v140, %v147
    %v149 = vsub.f32 %v132, %v148
    %v150 = vmul.f32 %v149, %v149
    %v151 = vrot.slane %v150, 4
    %v152 = vadd.f32 %v150, %v151
    %v153 = vrot.slane %v152, 2
    %v154 = vadd.f32 %v152, %v153
    %v155 = vrot.slane %v154, 1
    %v156 = vadd.f32 %v154, %v155
    %v157 = vmul.f32 %v156, %v147
    %v158 = vadd.f32 %v157, 1e-05
    %v159 = vrsqrt.pop %v158
    %v160 = vmul.f32 %v159, %v158
    %v161 = vmul.f32 %v160, %v159
    %v162 = vmul.f32 0.5, %v161
    %v163 = vsub.f32 1.5, %v162
    %v164 = vmul.f32 %v159, %v163
    %vm165 = vweird.f32 %v158
    %vm166 = vweird.f32 %v159
    %vm167 = vmor %vm165, %vm166
    %v168 = vsel %vm167, %v159, %v164
    %v169 = vmul.f32 %v99, %v168
    %v170 = vperm.slane %v169, 0
    %v171 = vmul.f32 %v149, %v170
    %v172 = vperm.slane %v99, 1
    %v173 = vadd.f32 %v171, %v172
    %v174 = vmax.f32 %v173, 0.0
    %v175 = vpack.c.bf16 %v174, %v174
    %v176 = vld [vmem:[#allocation7] sm:$0xf]
    %v177 = vld [vmem:[#allocation7 + $0x4] sm:$0xf]
    %v178 = vld [vmem:[#allocation7 + $0x8] sm:$0xf]
    %v179 = vld [vmem:[#allocation7 + $0xc] sm:$0xf]
    %v180 = vld [vmem:[#allocation7 + $0x10] sm:$0xf]
    %v181 = vld [vmem:[#allocation7 + $0x14] sm:$0xf]
    %v182 = vld [vmem:[#allocation7 + $0x18] sm:$0xf]
    %v183 = vld [vmem:[#allocation7 + $0x1c] sm:$0xf]
    %v184 = vld [vmem:[#allocation7 + $0x20] sm:$0xf]
    %v185 = vld [vmem:[#allocation7 + $0x24] sm:$0xf]
    %v186 = vld [vmem:[#allocation7 + $0x28] sm:$0xf]
    %v187 = vld [vmem:[#allocation7 + $0x2c] sm:$0xf]
    %v188 = vld [vmem:[#allocation7 + $0x30] sm:$0xf]
    %v189 = vld [vmem:[#allocation7 + $0x34] sm:$0xf]
    %v190 = vld [vmem:[#allocation7 + $0x38] sm:$0xf]
    %v191 = vld [vmem:[#allocation7 + $0x3c] sm:$0xf]
    %v208 = vunpack.c.l.b16 %v176
    %v209 = vunpack.c.l.b16 %v177
    %v210 = vunpack.c.l.b16 %v178
    %v211 = vunpack.c.l.b16 %v179
    %v212 = vunpack.c.l.b16 %v180
    %v213 = vunpack.c.l.b16 %v181
    %v214 = vunpack.c.l.b16 %v182
    %v215 = vunpack.c.l.b16 %v183
    %v216 = vunpack.c.l.b16 %v184
    %v217 = vunpack.c.l.b16 %v185
    %v218 = vunpack.c.l.b16 %v186
    %v219 = vunpack.c.l.b16 %v187
    %v220 = vunpack.c.l.b16 %v188
    %v221 = vunpack.c.l.b16 %v189
    %v222 = vunpack.c.l.b16 %v190
    %v223 = vunpack.c.l.b16 %v191
    %v224 = vpack.c.b16 %v209, %v208
    %v225 = vpack.c.b16 %v211, %v210
    %v226 = vpack.c.b16 %v213, %v212
    %v227 = vpack.c.b16 %v215, %v214
    %v228 = vpack.c.b16 %v217, %v216
    %v229 = vpack.c.b16 %v219, %v218
    %v230 = vpack.c.b16 %v221, %v220
    %v231 = vpack.c.b16 %v223, %v222
    %240 = vmatpush.bf16.msra.mxu0 %v231
    %241 = vmatpush.bf16.msra.mxu0 %v230
    %242 = vmatpush.bf16.msra.mxu0 %v229
    %243 = vmatpush.bf16.msra.mxu0 %v228
    %244 = vmatpush.bf16.msra.mxu0 %v227
    %245 = vmatpush.bf16.msra.mxu0 %v226
    %246 = vmatpush.bf16.msra.mxu0 %v225
    %247 = vmatpush.bf16.msra.mxu0 %v224
    %248 = vmatmul.bf16.gmra.mxu0 %v175
    %v249 = vpop.f32.mrf.mxu0
    %v250 = vadd.f32 0.0, %v249
    %v251 = vpop.f32.mrf.mxu0
    %252 = vdwg.mxu0
    %v253 = vrot.slane %v250, 4
    %v254 = vadd.f32 %v250, %v253
    %v255 = vrot.slane %v254, 2
    %v256 = vadd.f32 %v254, %v255
    %v257 = vrot.slane %v256, 1
    %v258 = vadd.f32 %v256, %v257
    %v259 = vmul.f32 %v258, %v147
    %v260 = vsub.f32 %v250, %v259
    %v261 = vmul.f32 %v260, %v260
    %v262 = vrot.slane %v261, 4
    %v263 = vadd.f32 %v261, %v262
    %v264 = vrot.slane %v263, 2
    %v265 = vadd.f32 %v263, %v264
    %v266 = vrot.slane %v265, 1
    %v267 = vadd.f32 %v265, %v266
    %v268 = vmul.f32 %v267, %v147
    %v269 = vadd.f32 %v268, 1e-05
    %v270 = vrsqrt.pop %v269
    %v271 = vmul.f32 %v270, %v269
    %v272 = vmul.f32 %v271, %v270
    %v273 = vmul.f32 0.5, %v272
    %v274 = vsub.f32 1.5, %v273
    %v275 = vmul.f32 %v270, %v274
    %vm276 = vweird.f32 %v269
    %vm277 = vweird.f32 %v270
    %vm278 = vmor %vm276, %vm277
    %v279 = vsel %vm278, %v270, %v275
    %v280 = vmul.f32 %v99, %v279
    %v281 = vperm.slane %v280, 2
    %v282 = vmul.f32 %v260, %v281
    %v283 = vperm.slane %v99, 3
    %v284 = vadd.f32 %v282, %v283
    %v285 = vmax.f32 %v284, 0.0
    %v286 = vpack.c.bf16 %v285, %v285
    %v287 = vld [vmem:[#allocation8] sm:$0xf]
    %v288 = vld [vmem:[#allocation8 + $0x4] sm:$0xf]
    %v289 = vld [vmem:[#allocation8 + $0x8] sm:$0xf]
    %v290 = vld [vmem:[#allocation8 + $0xc] sm:$0xf]
    %v291 = vld [vmem:[#allocation8 + $0x10] sm:$0xf]
    %v292 = vld [vmem:[#allocation8 + $0x14] sm:$0xf]
    %v293 = vld [vmem:[#allocation8 + $0x18] sm:$0xf]
    %v294 = vld [vmem:[#allocation8 + $0x1c] sm:$0xf]
    %v295 = vld [vmem:[#allocation8 + $0x20] sm:$0xf]
    %v296 = vld [vmem:[#allocation8 + $0x24] sm:$0xf]
    %v297 = vld [vmem:[#allocation8 + $0x28] sm:$0xf]
    %v298 = vld [vmem:[#allocation8 + $0x2c] sm:$0xf]
    %v299 = vld [vmem:[#allocation8 + $0x30] sm:$0xf]
    %v300 = vld [vmem:[#allocation8 + $0x34] sm:$0xf]
    %v301 = vld [vmem:[#allocation8 + $0x38] sm:$0xf]
    %v302 = vld [vmem:[#allocation8 + $0x3c] sm:$0xf]
    %v303 = vld [vmem:[%s5] sm:$0x1]
    %v305 = vperm.slane %v303, 0
    %v323 = vunpack.c.l.b16 %v287
    %v324 = vunpack.c.l.b16 %v288
    %v325 = vunpack.c.l.b16 %v289
    %v326 = vunpack.c.l.b16 %v290
    %v327 = vunpack.c.l.b16 %v291
    %v328 = vunpack.c.l.b16 %v292
    %v329 = vunpack.c.l.b16 %v293
    %v330 = vunpack.c.l.b16 %v294
    %v331 = vunpack.c.l.b16 %v295
    %v332 = vunpack.c.l.b16 %v296
    %v333 = vunpack.c.l.b16 %v297
    %v334 = vunpack.c.l.b16 %v298
    %v335 = vunpack.c.l.b16 %v299
    %v336 = vunpack.c.l.b16 %v300
    %v337 = vunpack.c.l.b16 %v301
    %v338 = vunpack.c.l.b16 %v302
    %v339 = vpack.c.b16 %v324, %v323
    %v340 = vpack.c.b16 %v326, %v325
    %v341 = vpack.c.b16 %v328, %v327
    %v342 = vpack.c.b16 %v330, %v329
    %v343 = vpack.c.b16 %v332, %v331
    %v344 = vpack.c.b16 %v334, %v333
    %v345 = vpack.c.b16 %v336, %v335
    %v346 = vpack.c.b16 %v338, %v337
    %355 = vmatpush.bf16.msra.mxu0 %v346
    %356 = vmatpush.bf16.msra.mxu0 %v345
    %357 = vmatpush.bf16.msra.mxu0 %v344
    %358 = vmatpush.bf16.msra.mxu0 %v343
    %359 = vmatpush.bf16.msra.mxu0 %v342
    %360 = vmatpush.bf16.msra.mxu0 %v341
    %361 = vmatpush.bf16.msra.mxu0 %v340
    %362 = vmatpush.bf16.msra.mxu0 %v339
    %363 = vmatmul.bf16.gmra.mxu0 %v286
    %v364 = vpop.f32.mrf.mxu0
    %v365 = vadd.f32 %v305, %v364
    %v366 = vpop.f32.mrf.mxu0
    %367 = vdwg.mxu0
    %368 = vst [vmem:[#allocation11] sm:$0xff] %v365
    // Predicated region
    $region46: #{tpu_custom_call.1} parent=1 // pred_check
      _
    $region47: #{tpu_custom_call.1} parent=1 // pred_check_branch
      %370 = sbr.rel (0) target = $region49
    $region48: #{tpu_custom_call.1} parent=1 // pred_region
      %372 = vsyncadd [#allocation4], 0
      %s374 = sshll.u32 [#allocation11], 4
      %s375 = int_to_ptr.vmem [resolvable:$true] %s374
      %s376 = sshll.u32 %s6, 4
      %s377 = int_to_ptr.hbm [resolvable:$true] %s376
      %379 = dma.vmem_to_hbm [thread:$0]  %s375, 128, %s377, [#allocation4]
    $region49: #{tpu_custom_call.1} parent=1 // pred_fallthru
      _
    // Predicated region
    $region50: #{tpu_custom_call.1} parent=1 // pred_check
      _
    $region51: #{tpu_custom_call.1} parent=1 // pred_check_branch
      %381 = sbr.rel (0) target = $region53
    $region52: #{tpu_custom_call.1} parent=1 // pred_region
      %383 = dma.done [#allocation4], 128
    $region53: #{tpu_custom_call.1} parent=1 // pred_fallthru
      _
    %384 = vsyncpa [#allocation3], 1
    %385 = vsyncpa [#allocation6], 1
    %386 = vsyncpa [#allocation9], 1
    %387 = vsyncpa [#allocation4], 1

</llo_original>
